<compile_context>
chip_gen: v7x
topology: tpu7x:2x2x1
jax: 0.10.0
libtpu: 0.0.40
codegen_flags: <defaults>
</compile_context>

<pallas_src>
import math

import jax
import jax.numpy as jnp
from jax.experimental import pallas as pl
from jax.experimental.pallas import tpu as pltpu

NPI_CORE_DIM = 256
KEY_DIM = 5
NUM_PROGRAM = 6

LANES = 128                       # lane-dense padded width for all small dims
W1_ROWS = NPI_CORE_DIM            # rows   0..255 of the slab : W1  (256, 128)
MEFF_ROW0 = W1_ROWS               # rows 256..383 of the slab : M_eff (128, 128)
BIAS_ROW0 = MEFF_ROW0 + LANES     # rows 384..391 of the slab : biases (8, 128)
SLAB_ROWS = BIAS_ROW0 + 8         # 392 rows total (multiple of 8 sublanes)


# ---------------------------------------------------------------------------
# Kernel
# ---------------------------------------------------------------------------
def key_net_kernel(h_ref, slab_ref, out_ref):
    h = h_ref[...]                                   # (TM, 256)  f32
    w1 = slab_ref[0:W1_ROWS, :]                      # (256, 128) zero-padded cols
    m_eff = slab_ref[MEFF_ROW0:BIAS_ROW0, :]         # (128, 128) zero-padded
    bias = slab_ref[BIAS_ROW0:SLAB_ROWS, :]          # (8, 128)   row0=b1, row1=c_eff
    b1 = bias[0:1, :]                                # (1, 128)
    c_eff = bias[1:2, :]                             # (1, 128)

    z1 = jnp.dot(h, w1, preferred_element_type=jnp.float32) + b1      # (TM, 128)
    a1 = jnp.maximum(z1, 0.0)                                          # ReLU
    out_ref[...] = (
        jnp.dot(a1, m_eff, preferred_element_type=jnp.float32) + c_eff  # (TM, 128)
    )


# ---------------------------------------------------------------------------
# Host-side parameter packing (one padded slab, constants folded)
# ---------------------------------------------------------------------------
def pack_params(program_key, params):
    """Build the (SLAB_ROWS, 128) f32 parameter slab."""
    w1, b1, w2, b2 = params
    m_eff = jnp.dot(w2, program_key.T)               # (KEY_DIM, NUM_PROGRAM)
    c_eff = jnp.dot(b2, program_key.T)               # (1, NUM_PROGRAM)

    w1_pad = jnp.zeros((NPI_CORE_DIM, LANES), jnp.float32).at[:, :KEY_DIM].set(w1)
    m_pad = jnp.zeros((LANES, LANES), jnp.float32).at[:KEY_DIM, :NUM_PROGRAM].set(m_eff)
    bias = jnp.zeros((8, LANES), jnp.float32)
    bias = bias.at[0, :KEY_DIM].set(b1[0])
    bias = bias.at[1, :NUM_PROGRAM].set(c_eff[0])
    return jnp.concatenate([w1_pad, m_pad, bias], axis=0)   # (392, 128)


# ---------------------------------------------------------------------------
# Wrappers
# ---------------------------------------------------------------------------
def key_net_forward_batched(program_key, hidden2d, params):
    """hidden2d: (B, NPI_CORE_DIM) float32  ->  (B, NUM_PROGRAM) float32."""
    B = hidden2d.shape[0]

    # Pick row tile / padding: small batches run as one block; large batches
    # tile at 128 rows and shard the grid across TensorCores.
    if B <= 128:
        b_pad = max(8, ((B + 7) // 8) * 8)
        tm = b_pad
    else:
        b_pad = ((B + 127) // 128) * 128
        tm = 128
    grid = (b_pad // tm,)

    h_pad = jnp.zeros((b_pad, NPI_CORE_DIM), jnp.float32).at[:B, :].set(hidden2d)
    slab = pack_params(program_key, params)

    cost = pl.CostEstimate(
        flops=2 * b_pad * NPI_CORE_DIM * LANES + 2 * b_pad * LANES * LANES,
        transcendentals=0,
        bytes_accessed=4 * (b_pad * NPI_CORE_DIM + SLAB_ROWS * LANES + b_pad * LANES),
    )

    out_pad = pl.pallas_call(
        key_net_kernel,
        out_shape=jax.ShapeDtypeStruct((b_pad, LANES), jnp.float32),
        grid=grid,
        in_specs=[
            pl.BlockSpec((tm, NPI_CORE_DIM), lambda i: (i, 0)),
            pl.BlockSpec((SLAB_ROWS, LANES), lambda i: (0, 0)),
        ],
        out_specs=pl.BlockSpec((tm, LANES), lambda i: (i, 0)),
        compiler_params=pltpu.CompilerParams(dimension_semantics=("parallel",)),
        cost_estimate=cost,
    )(h_pad, slab)

    return out_pad[:B, :NUM_PROGRAM]


def key_net_forward(program_key, hidden, params):
    """Original module signature: program_key (NUM_PROGRAM, KEY_DIM), hidden (1,1,256)."""
    hidden2d = hidden.reshape(1, NPI_CORE_DIM)       # torch: hidden.squeeze(0)
    return key_net_forward_batched(program_key, hidden2d, params)


# ---------------------------------------------------------------------------
# Init + pure-JAX reference for validation
# ---------------------------------------------------------------------------
def init_params(rng):
    """nn.Linear-style U(-1/sqrt(fan_in), 1/sqrt(fan_in)) init."""
    k1, k2, k3, k4 = jax.random.split(rng, 4)
    b1_bound = 1.0 / math.sqrt(NPI_CORE_DIM)
    b2_bound = 1.0 / math.sqrt(KEY_DIM)
    w1 = jax.random.uniform(k1, (NPI_CORE_DIM, KEY_DIM), jnp.float32, -b1_bound, b1_bound)
    b1 = jax.random.uniform(k2, (1, KEY_DIM), jnp.float32, -b1_bound, b1_bound)
    w2 = jax.random.uniform(k3, (KEY_DIM, KEY_DIM), jnp.float32, -b2_bound, b2_bound)
    b2 = jax.random.uniform(k4, (1, KEY_DIM), jnp.float32, -b2_bound, b2_bound)
    return (w1, b1, w2, b2)


def key_net_reference_batched(program_key, hidden2d, params):
    w1, b1, w2, b2 = params
    key = jnp.maximum(hidden2d @ w1 + b1, 0.0) @ w2 + b2     # (B, KEY_DIM)
    return key @ program_key.T                               # (B, NUM_PROGRAM)


# ---------------------------------------------------------------------------
# Main
# ---------------------------------------------------------------------------
if __name__ == "__main__":
    root = jax.random.PRNGKey(0)
    k_params, k_pkey, k_hidden, k_batch = jax.random.split(root, 4)

    params = init_params(k_params)
    program_key = jax.random.normal(k_pkey, (NUM_PROGRAM, KEY_DIM), jnp.float32)

    # 1) Original module shapes: hidden (1, 1, npi_core_dim)
    hidden = jax.random.normal(k_hidden, (1, 1, NPI_CORE_DIM), jnp.float32)
    prog_dist = key_net_forward(program_key, hidden, params)
    jax.block_until_ready(prog_dist)
    ref = key_net_reference_batched(program_key, hidden.reshape(1, NPI_CORE_DIM), params)
    assert prog_dist.shape == (1, NUM_PROGRAM)
    assert jnp.allclose(prog_dist, ref, atol=1e-5, rtol=1e-5), (prog_dist, ref)

    # 2) Batched path: many hidden states amortize the call overhead.
    B = 16
    hidden_b = jax.random.normal(k_batch, (B, NPI_CORE_DIM), jnp.float32)
    out_b = key_net_forward_batched(program_key, hidden_b, params)
    jax.block_until_ready(out_b)
    ref_b = key_net_reference_batched(program_key, hidden_b, params)
    assert out_b.shape == (B, NUM_PROGRAM)
    assert jnp.allclose(out_b, ref_b, atol=1e-5, rtol=1e-5), (out_b, ref_b)

    print("KERNEL_OK")
</pallas_src>

<mosaic_0001>
module attributes {stable_mosaic.version = 11 : i64} {
  func.func @key_net_kernel(%arg0: i32, %arg1: memref<8x256xf32, #tpu.memory_space<vmem>>, %arg2: memref<392x128xf32, #tpu.memory_space<vmem>>, %arg3: memref<8x128xf32, #tpu.memory_space<vmem>>) attributes {dimension_semantics = [#tpu.dimension_semantics<parallel>], iteration_bounds = array<i64: 1>, scalar_prefetch = 0 : i64, scratch_operands = 0 : i64, tpu.core_type = #tpu.core_type<tc>, window_params = [{transform_indices = @transform_0, window_bounds = array<i64: 8, 256>}, {pipeline_mode = #tpu.pipeline_mode<synchronous>, transform_indices = @transform_1, window_bounds = array<i64: 392, 128>}, {transform_indices = @transform_2, window_bounds = array<i64: 8, 128>}]} {
    %c0 = arith.constant 0 : index
    %c0_0 = arith.constant 0 : index
    %0 = vector.load %arg1[%c0, %c0_0] : memref<8x256xf32, #tpu.memory_space<vmem>>, vector<8x256xf32>
    %c0_1 = arith.constant 0 : index
    %c0_2 = arith.constant 0 : index
    %1 = vector.load %arg2[%c0_1, %c0_2] : memref<392x128xf32, #tpu.memory_space<vmem>>, vector<256x128xf32>
    %c256 = arith.constant 256 : index
    %c0_3 = arith.constant 0 : index
    %2 = vector.load %arg2[%c256, %c0_3] : memref<392x128xf32, #tpu.memory_space<vmem>>, vector<128x128xf32>
    %c384 = arith.constant 384 : index
    %c0_4 = arith.constant 0 : index
    %3 = vector.load %arg2[%c384, %c0_4] : memref<392x128xf32, #tpu.memory_space<vmem>>, vector<8x128xf32>
    %4 = vector.extract_strided_slice %3 {offsets = [0, 0], sizes = [1, 128], strides = [1, 1]} : vector<8x128xf32> to vector<1x128xf32>
    %5 = vector.extract_strided_slice %3 {offsets = [1, 0], sizes = [1, 128], strides = [1, 1]} : vector<8x128xf32> to vector<1x128xf32>
    %cst = arith.constant dense<0.000000e+00> : vector<8x128xf32>
    %6 = tpu.matmul %0, %1, %cst {dimension_numbers = #tpu.dot_dimension_numbers<[1], [0], [0], [1], [0, 0, 1, 1], [], []>} : vector<8x256xf32>, vector<256x128xf32>, vector<8x128xf32> -> vector<8x128xf32>
    %7 = vector.broadcast %4 : vector<1x128xf32> to vector<8x128xf32>
    %8 = arith.addf %6, %7 : vector<8x128xf32>
    %cst_5 = arith.constant 0.000000e+00 : f32
    %9 = vector.broadcast %cst_5 : f32 to vector<8x128xf32>
    %10 = arith.maximumf %8, %9 : vector<8x128xf32>
    %cst_6 = arith.constant dense<0.000000e+00> : vector<8x128xf32>
    %11 = tpu.matmul %10, %2, %cst_6 {dimension_numbers = #tpu.dot_dimension_numbers<[1], [0], [0], [1], [0, 0, 1, 1], [], []>} : vector<8x128xf32>, vector<128x128xf32>, vector<8x128xf32> -> vector<8x128xf32>
    %12 = vector.broadcast %5 : vector<1x128xf32> to vector<8x128xf32>
    %13 = arith.addf %11, %12 : vector<8x128xf32>
    %c0_7 = arith.constant 0 : index
    %c0_8 = arith.constant 0 : index
    %14 = vector.load %arg3[%c0_7, %c0_8] : memref<8x128xf32, #tpu.memory_space<vmem>>, vector<8x128xf32>
    tpu.vector_store %arg3[%c0_7, %c0_8], %13 {strides = array<i32>} : memref<8x128xf32, #tpu.memory_space<vmem>>, vector<8x128xf32>,
    return
  }
  func.func @transform_0(%arg0: i32) -> (i32, i32) {
    %c0_i32 = arith.constant 0 : i32
    %c0_i32_0 = arith.constant 0 : i32
    return %arg0, %c0_i32 : i32, i32
  }
  func.func @transform_1(%arg0: i32) -> (i32, i32) {
    %c0_i32 = arith.constant 0 : i32
    %c0_i32_0 = arith.constant 0 : i32
    %c0_i32_1 = arith.constant 0 : i32
    return %c0_i32, %c0_i32_0 : i32, i32
  }
  func.func @transform_2(%arg0: i32) -> (i32, i32) {
    %c0_i32 = arith.constant 0 : i32
    %c0_i32_0 = arith.constant 0 : i32
    return %arg0, %c0_i32 : i32, i32
  }
}

</mosaic_0001>

<llo_original>
// kernel: tpu_custom_call.1
$region0: #{tpu_custom_call.1}
  #allocation0 [shape = 'u32[]', space=smem, size = 0x4, offset = 0x4, fixed_abs, tag = 'smem constant byte address 0x4 - core index']
  #allocation1 [shape = 'u32[144,128]{1,0:T(1,128)}', space=vmem, size = 0x12000, scoped, tag = 'internal scratch']
  %s0 = inlined_call_operand.hbm [shape: f32[8,256], index: 0, kind: input, shape index: {}]
  %s1 = inlined_call_operand.hbm [shape: f32[392,128], index: 1, kind: input, shape index: {}]
  %s2 = inlined_call_operand.hbm [shape: f32[8,128], index: 2, kind: output, shape index: {}]
  %s3 = sld [smem:[#allocation0]]
  $region26: #{tpu_custom_call.1} parent=0
    _
  %s5 = ssub.s32 1, %s3
  %s6 = scalar_select 0, %s5, %s3
  $region1: #{tpu_custom_call.1} parent=0
    #allocation2 [shape = 'u8[8192]{0}', space=vmem, size = 0x2000, scoped, tag = 'input window, operand 0, single buffered']
    #allocation3 [shape = 's32[1]{0}', space=sflag, size = 0x4, scoped, tag = 'scoped memory for tpu_custom_call.1']
    #allocation4 [shape = 's32[1]{0}', space=sflag, size = 0x4, scoped, tag = 'scoped memory for tpu_custom_call.1']
    #allocation5 [shape = 'u8[200704]{0}', space=vmem, size = 0x31000, scoped, tag = 'input window, operand 1, single buffered']
    #allocation6 [shape = 's32[1]{0}', space=sflag, size = 0x4, scoped, tag = 'scoped memory for tpu_custom_call.1']
    #allocation7 [shape = 'u8[4096]{0}', space=vmem, size = 0x1000, scoped, tag = 'output window, operand 0, single buffered']
    %7 = vsyncpa [#allocation3], 0
    %8 = vsyncpa [#allocation6], 0
    %9 = vsyncpa [#allocation4], 0
    // Predicated region
    $region2: #{tpu_custom_call.1} parent=1 // pred_check
      _
    $region3: #{tpu_custom_call.1} parent=1 // pred_check_branch
      %11 = sbr.rel (0) target = $region5
    $region4: #{tpu_custom_call.1} parent=1 // pred_region
      %s13 = ssub.s32 256, 256
      %14 = vsyncadd [#allocation3], %s13
      %s16 = sshll.u32 [#allocation2], 4
      %s17 = int_to_ptr.vmem [resolvable:$true] %s16
      %19 = dma.hbm_to_vmem [thread:$0]  %s0, 256, %s17, [#allocation3]
    $region5: #{tpu_custom_call.1} parent=1 // pred_fallthru
      _
    // Predicated region
    $region6: #{tpu_custom_call.1} parent=1 // pred_check
      _
    $region7: #{tpu_custom_call.1} parent=1 // pred_check_branch
      %21 = sbr.rel (0) target = $region9
    $region8: #{tpu_custom_call.1} parent=1 // pred_region
      %s23 = ssub.s32 6272, 6272
      %24 = vsyncadd [#allocation6], %s23
      %s25 = sshll.u32 [#allocation5], 4
      %s26 = int_to_ptr.vmem [resolvable:$true] %s25
      %31 = dma.hbm_to_vmem [thread:$0]  %s1, 6272, %s26, [#allocation6], 128, 128, 8
    $region9: #{tpu_custom_call.1} parent=1 // pred_fallthru
      _
    // Predicated region
    $region10: #{tpu_custom_call.1} parent=1 // pred_check
      _
    $region11: #{tpu_custom_call.1} parent=1 // pred_check_branch
      %33 = sbr.rel (0) target = $region13
    $region12: #{tpu_custom_call.1} parent=1 // pred_region
      %34 = dma.done [#allocation3], 256
    $region13: #{tpu_custom_call.1} parent=1 // pred_fallthru
      _
    // Predicated region
    $region14: #{tpu_custom_call.1} parent=1 // pred_check
      _
    $region15: #{tpu_custom_call.1} parent=1 // pred_check_branch
      %36 = sbr.rel (0) target = $region17
    $region16: #{tpu_custom_call.1} parent=1 // pred_region
      %37 = dma.done [#allocation6], 6272
    $region17: #{tpu_custom_call.1} parent=1 // pred_fallthru
      _
    %v38 = vld [vmem:[#allocation2] sm:$0xff]
    %v39 = vld [vmem:[#allocation2 + $0x8] sm:$0xff]
    %v40 = vld [vmem:[#allocation5] sm:$0xff]
    %v41 = vld [vmem:[#allocation5 + $0x8] sm:$0xff]
    %v42 = vld [vmem:[#allocation5 + $0x10] sm:$0xff]
    %v43 = vld [vmem:[#allocation5 + $0x18] sm:$0xff]
    %v44 = vld [vmem:[#allocation5 + $0x20] sm:$0xff]
    %v45 = vld [vmem:[#allocation5 + $0x28] sm:$0xff]
    %v46 = vld [vmem:[#allocation5 + $0x30] sm:$0xff]
    %v47 = vld [vmem:[#allocation5 + $0x38] sm:$0xff]
    %v48 = vld [vmem:[#allocation5 + $0x40] sm:$0xff]
    %v49 = vld [vmem:[#allocation5 + $0x48] sm:$0xff]
    %v50 = vld [vmem:[#allocation5 + $0x50] sm:$0xff]
    %v51 = vld [vmem:[#allocation5 + $0x58] sm:$0xff]
    %v52 = vld [vmem:[#allocation5 + $0x60] sm:$0xff]
    %v53 = vld [vmem:[#allocation5 + $0x68] sm:$0xff]
    %v54 = vld [vmem:[#allocation5 + $0x70] sm:$0xff]
    %v55 = vld [vmem:[#allocation5 + $0x78] sm:$0xff]
    %v56 = vld [vmem:[#allocation5 + $0x80] sm:$0xff]
    %v57 = vld [vmem:[#allocation5 + $0x88] sm:$0xff]
    %v58 = vld [vmem:[#allocation5 + $0x90] sm:$0xff]
    %v59 = vld [vmem:[#allocation5 + $0x98] sm:$0xff]
    %v60 = vld [vmem:[#allocation5 + $0xa0] sm:$0xff]
    %v61 = vld [vmem:[#allocation5 + $0xa8] sm:$0xff]
    %v62 = vld [vmem:[#allocation5 + $0xb0] sm:$0xff]
    %v63 = vld [vmem:[#allocation5 + $0xb8] sm:$0xff]
    %v64 = vld [vmem:[#allocation5 + $0xc0] sm:$0xff]
    %v65 = vld [vmem:[#allocation5 + $0xc8] sm:$0xff]
    %v66 = vld [vmem:[#allocation5 + $0xd0] sm:$0xff]
    %v67 = vld [vmem:[#allocation5 + $0xd8] sm:$0xff]
    %v68 = vld [vmem:[#allocation5 + $0xe0] sm:$0xff]
    %v69 = vld [vmem:[#allocation5 + $0xe8] sm:$0xff]
    %v70 = vld [vmem:[#allocation5 + $0xf0] sm:$0xff]
    %v71 = vld [vmem:[#allocation5 + $0xf8] sm:$0xff]
    %v72 = vld [vmem:[#allocation5 + $0x100] sm:$0xff]
    %v73 = vld [vmem:[#allocation5 + $0x108] sm:$0xff]
    %v74 = vld [vmem:[#allocation5 + $0x110] sm:$0xff]
    %v75 = vld [vmem:[#allocation5 + $0x118] sm:$0xff]
    %v76 = vld [vmem:[#allocation5 + $0x120] sm:$0xff]
    %v77 = vld [vmem:[#allocation5 + $0x128] sm:$0xff]
    %v78 = vld [vmem:[#allocation5 + $0x130] sm:$0xff]
    %v79 = vld [vmem:[#allocation5 + $0x138] sm:$0xff]
    %v80 = vld [vmem:[#allocation5 + $0x140] sm:$0xff]
    %v81 = vld [vmem:[#allocation5 + $0x148] sm:$0xff]
    %v82 = vld [vmem:[#allocation5 + $0x150] sm:$0xff]
    %v83 = vld [vmem:[#allocation5 + $0x158] sm:$0xff]
    %v84 = vld [vmem:[#allocation5 + $0x160] sm:$0xff]
    %v85 = vld [vmem:[#allocation5 + $0x168] sm:$0xff]
    %v86 = vld [vmem:[#allocation5 + $0x170] sm:$0xff]
    %v87 = vld [vmem:[#allocation5 + $0x178] sm:$0xff]
    %v88 = vld [vmem:[#allocation5 + $0x180] sm:$0xff]
    %v89 = vlaneseq
    %v90 = vshrl.u32 %v89, 7
    %v91 = vsub.s32 0, %v90
    %v92 = vrot.slane %v88, %v91
    %93 = vmatprep.subr.mxu0 0.0
    %94 = vmatpush1.msra.mxu0 %v40
    %95 = vmatprep.subr.mxu0 0.0
    %96 = vmatpush1.msra.mxu0 %v41
    %97 = vmatprep.subr.mxu0 0.0
    %98 = vmatpush1.msra.mxu0 %v42
    %99 = vmatprep.subr.mxu0 0.0
    %100 = vmatpush1.msra.mxu0 %v43
    %101 = vmatprep.subr.mxu0 0.0
    %102 = vmatpush1.msra.mxu0 %v44
    %103 = vmatprep.subr.mxu0 0.0
    %104 = vmatpush1.msra.mxu0 %v45
    %105 = vmatprep.subr.mxu0 0.0
    %106 = vmatpush1.msra.mxu0 %v46
    %107 = vmatprep.subr.mxu0 0.0
    %108 = vmatpush1.msra.mxu0 %v47
    %109 = vmatprep.subr.mxu0 0.0
    %110 = vmatpush1.msra.mxu0 %v48
    %111 = vmatprep.subr.mxu0 0.0
    %112 = vmatpush1.msra.mxu0 %v49
    %113 = vmatprep.subr.mxu0 0.0
    %114 = vmatpush1.msra.mxu0 %v50
    %115 = vmatprep.subr.mxu0 0.0
    %116 = vmatpush1.msra.mxu0 %v51
    %117 = vmatprep.subr.mxu0 0.0
    %118 = vmatpush1.msra.mxu0 %v52
    %119 = vmatprep.subr.mxu0 0.0
    %120 = vmatpush1.msra.mxu0 %v53
    %121 = vmatprep.subr.mxu0 0.0
    %122 = vmatpush1.msra.mxu0 %v54
    %123 = vmatprep.subr.mxu0 0.0
    %124 = vmatpush1.msra.mxu0 %v55
    %125 = vmatprep.subr.mxu0 0.0
    %126 = vmatpush1.msra.mxu0 %v56
    %127 = vmatprep.subr.mxu0 0.0
    %128 = vmatpush1.msra.mxu0 %v57
    %129 = vmatprep.subr.mxu0 0.0
    %130 = vmatpush1.msra.mxu0 %v58
    %131 = vmatprep.subr.mxu0 0.0
    %132 = vmatpush1.msra.mxu0 %v59
    %133 = vmatprep.subr.mxu0 0.0
    %134 = vmatpush1.msra.mxu0 %v60
    %135 = vmatprep.subr.mxu0 0.0
    %136 = vmatpush1.msra.mxu0 %v61
    %137 = vmatprep.subr.mxu0 0.0
    %138 = vmatpush1.msra.mxu0 %v62
    %139 = vmatprep.subr.mxu0 0.0
    %140 = vmatpush1.msra.mxu0 %v63
    %141 = vmatprep.subr.mxu0 0.0
    %142 = vmatpush1.msra.mxu0 %v64
    %143 = vmatprep.subr.mxu0 0.0
    %144 = vmatpush1.msra.mxu0 %v65
    %145 = vmatprep.subr.mxu0 0.0
    %146 = vmatpush1.msra.mxu0 %v66
    %147 = vmatprep.subr.mxu0 0.0
    %148 = vmatpush1.msra.mxu0 %v67
    %149 = vmatprep.subr.mxu0 0.0
    %150 = vmatpush1.msra.mxu0 %v68
    %151 = vmatprep.subr.mxu0 0.0
    %152 = vmatpush1.msra.mxu0 %v69
    %153 = vmatprep.subr.mxu0 0.0
    %154 = vmatpush1.msra.mxu0 %v70
    %155 = vmatprep.subr.mxu0 0.0
    %156 = vmatpush1.msra.mxu0 %v71
    %157 = vmatprep.mubr.f32.mxu0 %v39
    %158 = vmatmul.mubr.f32.gmra.mrb[0].mxu0 %v38
    %v159 = vpop.f32.mrb[0].mxu0
    %v160 = vadd.f32 %v92, %v159
    %v161 = vpop.f32.mrb[0].mxu0
    %162 = vdwg.mxu0
    %v163 = vmax.f32 %v160, 0.0
    %v164 = vlaneseq
    %v165 = vshrl.u32 %v164, 7
    %v166 = vsub.s32 1, %v165
    %v167 = vrot.slane %v88, %v166
    %168 = vmatprep.subr.mxu0 0.0
    %169 = vmatpush1.msra.mxu0 %v72
    %170 = vmatprep.subr.mxu0 0.0
    %171 = vmatpush1.msra.mxu0 %v73
    %172 = vmatprep.subr.mxu0 0.0
    %173 = vmatpush1.msra.mxu0 %v74
    %174 = vmatprep.subr.mxu0 0.0
    %175 = vmatpush1.msra.mxu0 %v75
    %176 = vmatprep.subr.mxu0 0.0
    %177 = vmatpush1.msra.mxu0 %v76
    %178 = vmatprep.subr.mxu0 0.0
    %179 = vmatpush1.msra.mxu0 %v77
    %180 = vmatprep.subr.mxu0 0.0
    %181 = vmatpush1.msra.mxu0 %v78
    %182 = vmatprep.subr.mxu0 0.0
    %183 = vmatpush1.msra.mxu0 %v79
    %184 = vmatprep.subr.mxu0 0.0
    %185 = vmatpush1.msra.mxu0 %v80
    %186 = vmatprep.subr.mxu0 0.0
    %187 = vmatpush1.msra.mxu0 %v81
    %188 = vmatprep.subr.mxu0 0.0
    %189 = vmatpush1.msra.mxu0 %v82
    %190 = vmatprep.subr.mxu0 0.0
    %191 = vmatpush1.msra.mxu0 %v83
    %192 = vmatprep.subr.mxu0 0.0
    %193 = vmatpush1.msra.mxu0 %v84
    %194 = vmatprep.subr.mxu0 0.0
    %195 = vmatpush1.msra.mxu0 %v85
    %196 = vmatprep.subr.mxu0 0.0
    %197 = vmatpush1.msra.mxu0 %v86
    %198 = vmatprep.subr.mxu0 0.0
    %199 = vmatpush1.msra.mxu0 %v87
    %200 = vmatprep.subr.mxu0 0.0
    %201 = vmatpush1.msra.mxu0 0.0
    %202 = vmatprep.subr.mxu0 0.0
    %203 = vmatpush1.msra.mxu0 0.0
    %204 = vmatprep.subr.mxu0 0.0
    %205 = vmatpush1.msra.mxu0 0.0
    %206 = vmatprep.subr.mxu0 0.0
    %207 = vmatpush1.msra.mxu0 0.0
    %208 = vmatprep.subr.mxu0 0.0
    %209 = vmatpush1.msra.mxu0 0.0
    %210 = vmatprep.subr.mxu0 0.0
    %211 = vmatpush1.msra.mxu0 0.0
    %212 = vmatprep.subr.mxu0 0.0
    %213 = vmatpush1.msra.mxu0 0.0
    %214 = vmatprep.subr.mxu0 0.0
    %215 = vmatpush1.msra.mxu0 0.0
    %216 = vmatprep.subr.mxu0 0.0
    %217 = vmatpush1.msra.mxu0 0.0
    %218 = vmatprep.subr.mxu0 0.0
    %219 = vmatpush1.msra.mxu0 0.0
    %220 = vmatprep.subr.mxu0 0.0
    %221 = vmatpush1.msra.mxu0 0.0
    %222 = vmatprep.subr.mxu0 0.0
    %223 = vmatpush1.msra.mxu0 0.0
    %224 = vmatprep.subr.mxu0 0.0
    %225 = vmatpush1.msra.mxu0 0.0
    %226 = vmatprep.subr.mxu0 0.0
    %227 = vmatpush1.msra.mxu0 0.0
    %228 = vmatprep.subr.mxu0 0.0
    %229 = vmatpush1.msra.mxu0 0.0
    %230 = vmatprep.subr.mxu0 0.0
    %231 = vmatpush1.msra.mxu0 0.0
    %232 = vmatprep.mubr.f32.mxu0 0.0
    %233 = vmatmul.mubr.f32.gmra.mrb[0].mxu0 %v163
    %v234 = vpop.f32.mrb[0].mxu0
    %v235 = vadd.f32 %v167, %v234
    %v236 = vpop.f32.mrb[0].mxu0
    %237 = vdwg.mxu0
    %238 = vst [vmem:[#allocation7] sm:$0xff] %v235
    // Predicated region
    $region18: #{tpu_custom_call.1} parent=1 // pred_check
      _
    $region19: #{tpu_custom_call.1} parent=1 // pred_check_branch
      %240 = sbr.rel (0) target = $region21
    $region20: #{tpu_custom_call.1} parent=1 // pred_region
      %s242 = ssub.s32 128, 128
      %243 = vsyncadd [#allocation4], %s242
      %s245 = sshll.u32 [#allocation7], 4
      %s246 = int_to_ptr.vmem [resolvable:$true] %s245
      %248 = dma.vmem_to_hbm [thread:$0]  %s246, 128, %s2, [#allocation4]
    $region21: #{tpu_custom_call.1} parent=1 // pred_fallthru
      _
    // Predicated region
    $region22: #{tpu_custom_call.1} parent=1 // pred_check
      _
    $region23: #{tpu_custom_call.1} parent=1 // pred_check_branch
      %250 = sbr.rel (0) target = $region25
    $region24: #{tpu_custom_call.1} parent=1 // pred_region
      %251 = dma.done [#allocation4], 128
    $region25: #{tpu_custom_call.1} parent=1 // pred_fallthru
      _
    %252 = vsyncpa [#allocation3], 1
    %253 = vsyncpa [#allocation6], 1
    %254 = vsyncpa [#allocation4], 1

</llo_original>
